<compile_context>
chip_gen: v5e
topology: v5e:2x2
jax: 0.10.0
libtpu: 0.0.40
codegen_flags: <defaults>
</compile_context>

<pallas_src>
import functools

import jax
import jax.numpy as jnp
from jax.experimental import pallas as pl
from jax.experimental.pallas import tpu as pltpu

BN_EPS = 1e-5
LANE = 128
_X_RESIDENT_BYTES = 12 << 20   # keep full activation block resident below this
_VMEM_SOFT_CAP = 60 << 20      # stay under v7x's 64 MiB physical VMEM


def _round_up(n, m):
    return ((n + m - 1) // m) * m


def _cdiv(a, b):
    return -(-a // b)


def _split(extent, target_tile, min_tiles=1):
    """Balanced, 128-aligned split. Returns (tile, padded_extent), padded % tile == 0."""
    ext = _round_up(extent, LANE)
    tiles = max(_cdiv(ext, max(target_tile, LANE)), min_tiles)
    tile = _round_up(_cdiv(ext, tiles), LANE)
    tiles = _cdiv(ext, tile)
    return tile, tile * tiles


def fc_embedding_kernel(x_ref, w_ref, gamma_ref, beta_ref, o_ref, *,
                        tk, inv_batch, x_resident):
    """Grid = (O tiles [parallel], K tiles [reduction, innermost])."""
    k = pl.program_id(1)

    if x_resident:
        # x block is the full (B, D_pad) activation, resident across the grid;
        # take the aligned K chunk in-kernel (no redundant HBM traffic).
        start = pl.multiple_of(k * tk, tk)
        xk = x_ref[:, pl.ds(start, tk)]
    else:
        xk = x_ref[...]
    if w_ref.dtype != xk.dtype:
        xk = xk.astype(w_ref.dtype)          # native MXU width when streaming bf16 weights

    prod = jnp.dot(xk, w_ref[...], preferred_element_type=jnp.float32)

    # Accumulate directly into the resident f32 output block (no scratch).
    @pl.when(k == 0)
    def _first():
        o_ref[...] = prod

    @pl.when(k > 0)
    def _accum():
        o_ref[...] += prod

    @pl.when(k == pl.num_programs(1) - 1)
    def _finalize():
        # BatchNorm1d training mode: per-feature batch mean / biased variance,
        # fused in place. Two-pass variance (center first) avoids cancellation.
        f = o_ref[...]
        mean = jnp.sum(f, axis=0, keepdims=True) * inv_batch
        centered = f - mean
        var = jnp.sum(centered * centered, axis=0, keepdims=True) * inv_batch
        scale = jax.lax.rsqrt(var + BN_EPS) * gamma_ref[...]
        o_ref[...] = centered * scale + beta_ref[...]


def prepare_params(w, gamma, beta, *, to=512, tk=1024, stream_dtype=None):
    """Pad / cast the static parameters ONCE (not per forward call).

    w: (O, D) Linear weight in PyTorch layout. stream_dtype=jnp.bfloat16 halves
    the dominant weight HBM stream while keeping f32 MXU accumulation.
    """
    O, D = w.shape
    TK, D_pad = _split(D, tk)
    # Prefer >= 2 output tiles so the "parallel" O axis can use both v7x TCs.
    TO, O_pad = _split(O, to, min_tiles=2)

    w_t = jnp.asarray(w, jnp.float32).T                       # (D, O)
    w_t = jnp.pad(w_t, ((0, D_pad - D), (0, O_pad - O)))
    if stream_dtype is not None:
        w_t = w_t.astype(stream_dtype)
    gamma_p = jnp.pad(jnp.asarray(gamma, jnp.float32)[None, :],
                      ((0, 0), (0, O_pad - O)))
    beta_p = jnp.pad(jnp.asarray(beta, jnp.float32)[None, :],
                     ((0, 0), (0, O_pad - O)))
    return dict(w_t=w_t, gamma=gamma_p, beta=beta_p, TK=TK, TO=TO,
                D=D, O=O, D_pad=D_pad, O_pad=O_pad)


def fc_embedding(x, params):
    """Forward pass: Linear(bias=False) -> BatchNorm1d (training-mode stats)."""
    w_t, gamma, beta = params["w_t"], params["gamma"], params["beta"]
    TK, TO = params["TK"], params["TO"]
    D, O = params["D"], params["O"]
    D_pad, O_pad = params["D_pad"], params["O_pad"]

    B = x.shape[0]
    assert x.shape[1] == D
    x = jnp.asarray(x, jnp.float32)
    if D_pad != D:
        x = jnp.pad(x, ((0, 0), (0, D_pad - D)))   # zero pad: no matmul effect

    grid_o, grid_k = O_pad // TO, D_pad // TK

    x_bytes = x.dtype.itemsize
    w_bytes = w_t.dtype.itemsize
    x_resident = B * D_pad * x_bytes <= _X_RESIDENT_BYTES
    # TODO(synk): for very large B, tile the batch axis and accumulate
    # per-feature sum / sum-of-squares in a small (2, TO) scratch with a second
    # normalization sweep; here we simply fall back to streaming x per K tile.

    if x_resident:
        x_spec = pl.BlockSpec((B, D_pad), lambda j, k: (0, 0))   # fetched once
    else:
        x_spec = pl.BlockSpec((B, TK), lambda j, k: (0, k))

    kernel = functools.partial(
        fc_embedding_kernel, tk=TK, inv_batch=1.0 / float(B),
        x_resident=x_resident)

    # Conservative VMEM budget (double-buffer everything) -> scoped limit.
    x_block_bytes = (B * D_pad if x_resident else B * TK) * x_bytes
    est = 2 * (TK * TO * w_bytes + x_block_bytes + B * TO * 4 + 2 * TO * 4)
    vmem_limit = min(max(32 << 20, int(1.5 * est) + (2 << 20)), _VMEM_SOFT_CAP)

    x_reads = 1 if x_resident else grid_o
    cost = pl.CostEstimate(
        flops=2 * B * D_pad * O_pad,
        transcendentals=0,
        bytes_accessed=(x_reads * B * D_pad * x_bytes
                        + D_pad * O_pad * w_bytes
                        + B * O_pad * 4
                        + 2 * grid_o * TO * 4),
    )

    out = pl.pallas_call(
        kernel,
        out_shape=jax.ShapeDtypeStruct((B, O_pad), jnp.float32),
        grid_spec=pltpu.PrefetchScalarGridSpec(
            num_scalar_prefetch=0,
            grid=(grid_o, grid_k),
            in_specs=[
                x_spec,
                pl.BlockSpec((TK, TO), lambda j, k: (k, j)),   # weight stream
                pl.BlockSpec((1, TO), lambda j, k: (0, j)),    # gamma
                pl.BlockSpec((1, TO), lambda j, k: (0, j)),    # beta
            ],
            out_specs=pl.BlockSpec((B, TO), lambda j, k: (0, j)),  # resident f32 acc
        ),
        compiler_params=pltpu.CompilerParams(
            dimension_semantics=("parallel", "arbitrary"),
            vmem_limit_bytes=vmem_limit,
        ),
        cost_estimate=cost,
    )(x, w_t, gamma, beta)

    return out[:, :O]


def init_params(key, input_dim, out_dim):
    """Deterministic synthetic init matching weights_init_kaiming conventions."""
    k_w, k_g = jax.random.split(key)
    # Linear weight: kaiming_normal_(mode='fan_out') -> std = sqrt(2 / out_dim)
    w = jax.random.normal(k_w, (out_dim, input_dim), jnp.float32) * jnp.sqrt(
        2.0 / out_dim)
    # BatchNorm: weight ~ N(1.0, 0.02), bias = 0
    gamma = 1.0 + 0.02 * jax.random.normal(k_g, (out_dim,), jnp.float32)
    beta = jnp.zeros((out_dim,), jnp.float32)
    return w, gamma, beta


def reference_forward(x, w, gamma, beta):
    """Pure-JAX reference of the PyTorch forward (training-mode BN)."""
    f = x @ w.T
    mean = jnp.mean(f, axis=0, keepdims=True)
    var = jnp.mean((f - mean) ** 2, axis=0, keepdims=True)
    return (f - mean) / jnp.sqrt(var + BN_EPS) * gamma[None, :] + beta[None, :]


if __name__ == "__main__":
    key = jax.random.PRNGKey(0)

    # Case 1: shapes needing padding + a multi-tile (2, 2) grid, resident x.
    B, input_dim, out_dim = 8, 150, 200
    k_x, k_p = jax.random.split(key)
    x = jax.random.normal(k_x, (B, input_dim), jnp.float32)
    w, gamma, beta = init_params(k_p, input_dim, out_dim)
    params = prepare_params(w, gamma, beta, to=128, tk=128)
    out = jax.block_until_ready(fc_embedding(x, params))
    ref = reference_forward(x, w, gamma, beta)
    assert out.shape == (B, out_dim)
    assert jnp.allclose(out, ref, atol=1e-4, rtol=1e-4)

    # Case 2: original small shapes, default tile sizes (single-tile grid).
    B2, in2, out2 = 8, 32, 64
    k_x2, k_p2 = jax.random.split(jax.random.PRNGKey(1))
    x2 = jax.random.normal(k_x2, (B2, in2), jnp.float32)
    w2, g2, b2 = init_params(k_p2, in2, out2)
    params2 = prepare_params(w2, g2, b2)           # defaults: to=512, tk=1024
    out2_v = jax.block_until_ready(fc_embedding(x2, params2))
    ref2 = reference_forward(x2, w2, g2, b2)
    assert out2_v.shape == (B2, out2)
    assert jnp.allclose(out2_v, ref2, atol=1e-4, rtol=1e-4)

    # Case 3: bf16 weight streaming (halves the dominant HBM traffic); f32
    # accumulation keeps BN stats accurate -> loose tolerance vs f32 reference.
    B3, in3, out3 = 16, 256, 384
    k_x3, k_p3 = jax.random.split(jax.random.PRNGKey(2))
    x3 = jax.random.normal(k_x3, (B3, in3), jnp.float32)
    w3, g3, b3 = init_params(k_p3, in3, out3)
    params3 = prepare_params(w3, g3, b3, to=256, tk=128,
                             stream_dtype=jnp.bfloat16)
    out3_v = jax.block_until_ready(fc_embedding(x3, params3))
    ref3 = reference_forward(x3, w3, g3, b3)
    assert out3_v.shape == (B3, out3)
    assert jnp.all(jnp.isfinite(out3_v))
    assert jnp.allclose(out3_v, ref3, atol=1e-1, rtol=1e-1)

    # NOTE: BatchNorm running_mean/running_var buffer updates (a training-time
    # side effect) are not materialized; the forward output does not use them.
    print("KERNEL_OK")
</pallas_src>

<mosaic_0001>
module attributes {stable_mosaic.version = 11 : i64} {
  func.func @fc_embedding_kernel(%arg0: i32, %arg1: i32, %arg2: memref<8x256xf32, #tpu.memory_space<vmem>>, %arg3: memref<128x128xf32, #tpu.memory_space<vmem>>, %arg4: memref<1x128xf32, #tpu.memory_space<vmem>>, %arg5: memref<1x128xf32, #tpu.memory_space<vmem>>, %arg6: memref<8x128xf32, #tpu.memory_space<vmem>>) attributes {dimension_semantics = [#tpu.dimension_semantics<parallel>, #tpu.dimension_semantics<arbitrary>], iteration_bounds = array<i64: 2, 2>, scalar_prefetch = 0 : i64, scratch_operands = 0 : i64, tpu.core_type = #tpu.core_type<tc>, window_params = [{pipeline_mode = #tpu.pipeline_mode<synchronous>, transform_indices = @transform_0, window_bounds = array<i64: 8, 256>}, {transform_indices = @transform_1, window_bounds = array<i64: 128, 128>}, {transform_indices = @transform_2, window_bounds = array<i64: 1, 128>}, {transform_indices = @transform_3, window_bounds = array<i64: 1, 128>}, {transform_indices = @transform_4, window_bounds = array<i64: 8, 128>}]} {
    %c128_i32 = arith.constant 128 : i32
    %0 = arith.muli %arg1, %c128_i32 : i32
    %1 = tpu.assume_multiple %0, 128 : i32
    %c0 = arith.constant 0 : index
    %2 = arith.index_cast %1 : i32 to index
    %3 = vector.load %arg2[%c0, %2] : memref<8x256xf32, #tpu.memory_space<vmem>>, vector<8x128xf32>
    %c0_0 = arith.constant 0 : index
    %c0_1 = arith.constant 0 : index
    %4 = vector.load %arg3[%c0_0, %c0_1] : memref<128x128xf32, #tpu.memory_space<vmem>>, vector<128x128xf32>
    %cst = arith.constant dense<0.000000e+00> : vector<8x128xf32>
    %5 = tpu.matmul %3, %4, %cst {dimension_numbers = #tpu.dot_dimension_numbers<[1], [0], [0], [1], [0, 0, 1, 1], [], []>} : vector<8x128xf32>, vector<128x128xf32>, vector<8x128xf32> -> vector<8x128xf32>
    %c0_i32 = arith.constant 0 : i32
    %6 = arith.cmpi eq, %arg1, %c0_i32 : i32
    %7 = arith.extui %6 : i1 to i32
    %c0_i32_2 = arith.constant 0 : i32
    %8 = arith.cmpi ne, %7, %c0_i32_2 : i32
    scf.if %8 {
      %c0_6 = arith.constant 0 : index
      %c0_7 = arith.constant 0 : index
      %15 = vector.load %arg6[%c0_6, %c0_7] : memref<8x128xf32, #tpu.memory_space<vmem>>, vector<8x128xf32>
      tpu.vector_store %arg6[%c0_6, %c0_7], %5 {strides = array<i32>} : memref<8x128xf32, #tpu.memory_space<vmem>>, vector<8x128xf32>,
    } else {
    }
    %c0_i32_3 = arith.constant 0 : i32
    %9 = arith.cmpi sgt, %arg1, %c0_i32_3 : i32
    %10 = arith.extui %9 : i1 to i32
    %c0_i32_4 = arith.constant 0 : i32
    %11 = arith.cmpi ne, %10, %c0_i32_4 : i32
    scf.if %11 {
      %c0_6 = arith.constant 0 : index
      %c0_7 = arith.constant 0 : index
      %15 = vector.load %arg6[%c0_6, %c0_7] : memref<8x128xf32, #tpu.memory_space<vmem>>, vector<8x128xf32>
      %16 = arith.addf %15, %5 : vector<8x128xf32>
      %c0_8 = arith.constant 0 : index
      %c0_9 = arith.constant 0 : index
      %17 = vector.load %arg6[%c0_8, %c0_9] : memref<8x128xf32, #tpu.memory_space<vmem>>, vector<8x128xf32>
      tpu.vector_store %arg6[%c0_8, %c0_9], %16 {strides = array<i32>} : memref<8x128xf32, #tpu.memory_space<vmem>>, vector<8x128xf32>,
    } else {
    }
    %c1_i32 = arith.constant 1 : i32
    %12 = arith.cmpi eq, %arg1, %c1_i32 : i32
    %13 = arith.extui %12 : i1 to i32
    %c0_i32_5 = arith.constant 0 : i32
    %14 = arith.cmpi ne, %13, %c0_i32_5 : i32
    scf.if %14 {
      %c0_6 = arith.constant 0 : index
      %c0_7 = arith.constant 0 : index
      %15 = vector.load %arg6[%c0_6, %c0_7] : memref<8x128xf32, #tpu.memory_space<vmem>>, vector<8x128xf32>
      %cst_8 = arith.constant dense<0.000000e+00> : vector<128xf32>
      %16 = vector.multi_reduction <add>, %15, %cst_8 [0] : vector<8x128xf32> to vector<128xf32>
      %17 = vector.shape_cast %16 : vector<128xf32> to vector<1x128xf32>
      %cst_9 = arith.constant 1.250000e-01 : f32
      %18 = vector.broadcast %cst_9 : f32 to vector<1x128xf32>
      %19 = arith.mulf %17, %18 : vector<1x128xf32>
      %20 = vector.broadcast %19 : vector<1x128xf32> to vector<8x128xf32>
      %21 = arith.subf %15, %20 : vector<8x128xf32>
      %22 = arith.mulf %21, %21 : vector<8x128xf32>
      %cst_10 = arith.constant dense<0.000000e+00> : vector<128xf32>
      %23 = vector.multi_reduction <add>, %22, %cst_10 [0] : vector<8x128xf32> to vector<128xf32>
      %24 = vector.shape_cast %23 : vector<128xf32> to vector<1x128xf32>
      %cst_11 = arith.constant 1.250000e-01 : f32
      %25 = vector.broadcast %cst_11 : f32 to vector<1x128xf32>
      %26 = arith.mulf %24, %25 : vector<1x128xf32>
      %cst_12 = arith.constant 9.99999974E-6 : f32
      %27 = vector.broadcast %cst_12 : f32 to vector<1x128xf32>
      %28 = arith.addf %26, %27 : vector<1x128xf32>
      %29 = math.rsqrt %28 : vector<1x128xf32>
      %c0_13 = arith.constant 0 : index
      %c0_14 = arith.constant 0 : index
      %30 = vector.load %arg4[%c0_13, %c0_14] : memref<1x128xf32, #tpu.memory_space<vmem>>, vector<1x128xf32>
      %31 = arith.mulf %29, %30 : vector<1x128xf32>
      %32 = vector.broadcast %31 : vector<1x128xf32> to vector<8x128xf32>
      %33 = arith.mulf %21, %32 : vector<8x128xf32>
      %c0_15 = arith.constant 0 : index
      %c0_16 = arith.constant 0 : index
      %34 = vector.load %arg5[%c0_15, %c0_16] : memref<1x128xf32, #tpu.memory_space<vmem>>, vector<1x128xf32>
      %35 = vector.broadcast %34 : vector<1x128xf32> to vector<8x128xf32>
      %36 = arith.addf %33, %35 : vector<8x128xf32>
      %c0_17 = arith.constant 0 : index
      %c0_18 = arith.constant 0 : index
      %37 = vector.load %arg6[%c0_17, %c0_18] : memref<8x128xf32, #tpu.memory_space<vmem>>, vector<8x128xf32>
      tpu.vector_store %arg6[%c0_17, %c0_18], %36 {strides = array<i32>} : memref<8x128xf32, #tpu.memory_space<vmem>>, vector<8x128xf32>,
    } else {
    }
    return
  }
  func.func @transform_0(%arg0: i32, %arg1: i32) -> (i32, i32) {
    %c0_i32 = arith.constant 0 : i32
    %c0_i32_0 = arith.constant 0 : i32
    %c0_i32_1 = arith.constant 0 : i32
    return %c0_i32, %c0_i32_0 : i32, i32
  }
  func.func @transform_1(%arg0: i32, %arg1: i32) -> (i32, i32) {
    %c0_i32 = arith.constant 0 : i32
    return %arg1, %arg0 : i32, i32
  }
  func.func @transform_2(%arg0: i32, %arg1: i32) -> (i32, i32) {
    %c0_i32 = arith.constant 0 : i32
    %c0_i32_0 = arith.constant 0 : i32
    return %c0_i32, %arg0 : i32, i32
  }
  func.func @transform_3(%arg0: i32, %arg1: i32) -> (i32, i32) {
    %c0_i32 = arith.constant 0 : i32
    %c0_i32_0 = arith.constant 0 : i32
    return %c0_i32, %arg0 : i32, i32
  }
  func.func @transform_4(%arg0: i32, %arg1: i32) -> (i32, i32) {
    %c0_i32 = arith.constant 0 : i32
    %c0_i32_0 = arith.constant 0 : i32
    return %c0_i32, %arg0 : i32, i32
  }
}

</mosaic_0001>

<llo_original>
// kernel: tpu_custom_call.1
$region0: #{tpu_custom_call.1}
  #allocation0 [shape = 'u32[]', space=smem, size = 0x4, offset = 0x4, fixed_abs, tag = 'smem constant byte address 0x4 - core index']
  #allocation1 [shape = 'u32[72,128]{1,0:T(1,128)}', space=vmem, size = 0x9000, scoped, tag = 'internal scratch']
  %s0 = inlined_call_operand.hbm [shape: f32[8,256], index: 0, kind: input, shape index: {}]
  %s1 = inlined_call_operand.hbm [shape: f32[256,256], index: 1, kind: input, shape index: {}]
  %s2 = inlined_call_operand.hbm [shape: f32[1,256], index: 2, kind: input, shape index: {}]
  %s3 = inlined_call_operand.vmem [shape: f32[1,256], index: 3, kind: input, shape index: {}]
  %s4 = inlined_call_operand.hbm [shape: f32[8,256], index: 4, kind: output, shape index: {}]
  %s5 = sld [smem:[#allocation0]]
  $region73: #{tpu_custom_call.1} parent=0
    _
  %s7 = ssub.s32 1, %s5
  %s8 = scalar_select 0, %s7, %s5
  $region1: #{tpu_custom_call.1} parent=0
    #allocation2 [shape = 'u8[8192]{0}', space=vmem, size = 0x2000, scoped, tag = 'input window, operand 0, single buffered']
    #allocation3 [shape = 's32[2]{0}', space=sflag, size = 0x8, scoped, tag = 'scoped memory for tpu_custom_call.1']
    #allocation4 [shape = 's32[2]{0}', space=sflag, size = 0x8, scoped, tag = 'scoped memory for tpu_custom_call.1']
    #allocation5 [shape = 'u8[131072]{0}', space=vmem, size = 0x20000, scoped, tag = 'input window, operand 1']
    #allocation6 [shape = 's32[2]{0}', space=sflag, size = 0x8, scoped, tag = 'scoped memory for tpu_custom_call.1']
    #allocation7 [shape = 'u8[1024]{0}', space=vmem, size = 0x400, scoped, tag = 'input window, operand 2']
    #allocation8 [shape = 'u8[8192]{0}', space=vmem, size = 0x2000, scoped, tag = 'output window, operand 0']
    %9 = vsyncpa [#allocation3], 0
    %10 = vsyncpa [#allocation6], 0
    %s11 = scalar_lea.sflag [#allocation6], 1
    %12 = vsyncpa %s11, 0
    %13 = vsyncpa [#allocation4], 0
    %s14 = scalar_lea.sflag [#allocation4], 1
    %15 = vsyncpa %s14, 0
    loop: start=0, step=1, limit=6
    $region2: #{tpu_custom_call.1} parent=1 // loop_pre_header
      _
    $region3: #{tpu_custom_call.1} parent=1 // loop_header
      %s17 = sphi 0, %s21
      %p18 = scmp.ge.s32.totalorder %s17, 6
      %s24 = sphi 0, %s36
      %s25 = sphi 0, %s32
      %s26 = sphi 0, %s24
      %s27 = sphi 0, %s25
      %s28 = sphi 0, %s26
      %s29 = sphi 0, %s27
      %s37 = sphi 0, %s37
      %s39 = sphi 0, %s37
      %s40 = sphi 0, %s39
      %s54 = sphi 0, %s40
      %s62 = sphi 0, %s64
      %s65 = sphi 0, %s62
      %s66 = sphi 0, %s65
      %s82 = sphi 0, %s66
      %s88 = sphi 0, %s90
      %s91 = sphi 0, %s88
      %s92 = sphi 0, %s91
      %s108 = sphi 0, %s92
      %s114 = sphi 0, %s116
      %s117 = sphi 0, %s114
      %s118 = sphi 0, %s117
      %s134 = sphi 0, %s118
      %s140 = sphi 0, %s142
      %s143 = sphi 0, %s140
      %s144 = sphi 0, %s143
      %s160 = sphi 0, %s144
    $region4: #{tpu_custom_call.1} parent=1 // loop_header_branch
      %20 = sbr.rel (%p18) target = $region8
    $region5: #{tpu_custom_call.1} parent=1 // loop_body
      %s22 = ssub.s32 %s17, 1
      %s23 = ssub.s32 %s17, 2
      %s30 = sadd.s32 1, %s25
      %p31 = scmp.ge.s32.totalorder %s30, 2
      %s32 = scalar_select %p31, 0, %s30
      %s33 = sadd.s32 1, %s24
      %s34 = scalar_select %p31, %s33, %s24
      %p35 = scmp.ge.s32.totalorder %s34, 2
      %s36 = scalar_select %p35, 0, %s34
      %s38 = sadd.s32 %s37, 1
      %p41 = scmp.eq.s32.totalorder %s17, 3
      %p42 = scmp.ne.s32.totalorder %s37, %s39
      %p43 = scmp.eq.s32.totalorder %s17, 0
      %p44 = por %p42, %p43
      %p45 = scmp.ne.s32.totalorder %s37, %s39
      %p46 = scmp.eq.s32.totalorder %s22, 3
      %p47 = por %p45, %p46
      %p48 = scmp.ne.s32.totalorder %s39, %s40
      %p49 = scmp.eq.s32.totalorder %s22, 0
      %p50 = por %p48, %p49
      %p51 = scmp.ne.s32.totalorder %s39, %s40
      %p52 = scmp.eq.s32.totalorder %s23, 3
      %p53 = por %p51, %p52
      %p55 = scmp.ne.s32.totalorder %s40, %s54
      %p56 = scmp.eq.s32.totalorder %s23, 0
      %p57 = por %p55, %p56
      %s58 = ssub.s32 %s25, %s32
      %s59 = ssub.s32 %s24, %s36
      %s60 = sor.u32 %s58, %s59
      %p61 = scmp.eq.s32.totalorder %s60, 0
      %s63 = sadd.s32 %s62, 1
      %s64 = scalar_select %p61, %s62, %s63
      %p67 = pneg %p61
      %p68 = scmp.eq.s32.totalorder %s17, 3
      %p69 = por %p67, %p68
      %p70 = scmp.ne.s32.totalorder %s62, %s65
      %p71 = scmp.eq.s32.totalorder %s17, 0
      %p72 = por %p70, %p71
      %p73 = scmp.ne.s32.totalorder %s62, %s65
      %p74 = scmp.eq.s32.totalorder %s22, 3
      %p75 = por %p73, %p74
      %p76 = scmp.ne.s32.totalorder %s65, %s66
      %p77 = scmp.eq.s32.totalorder %s22, 0
      %p78 = por %p76, %p77
      %p79 = scmp.ne.s32.totalorder %s65, %s66
      %p80 = scmp.eq.s32.totalorder %s23, 3
      %p81 = por %p79, %p80
      %p83 = scmp.ne.s32.totalorder %s66, %s82
      %p84 = scmp.eq.s32.totalorder %s23, 0
      %p85 = por %p83, %p84
      %s86 = ssub.s32 %s24, %s36
      %p87 = scmp.eq.s32.totalorder %s86, 0
      %s89 = sadd.s32 %s88, 1
      %s90 = scalar_select %p87, %s88, %s89
      %p93 = pneg %p87
      %p94 = scmp.eq.s32.totalorder %s17, 3
      %p95 = por %p93, %p94
      %p96 = scmp.ne.s32.totalorder %s88, %s91
      %p97 = scmp.eq.s32.totalorder %s17, 0
      %p98 = por %p96, %p97
      %p99 = scmp.ne.s32.totalorder %s88, %s91
      %p100 = scmp.eq.s32.totalorder %s22, 3
      %p101 = por %p99, %p100
      %p102 = scmp.ne.s32.totalorder %s91, %s92
      %p103 = scmp.eq.s32.totalorder %s22, 0
      %p104 = por %p102, %p103
      %p105 = scmp.ne.s32.totalorder %s91, %s92
      %p106 = scmp.eq.s32.totalorder %s23, 3
      %p107 = por %p105, %p106
      %p109 = scmp.ne.s32.totalorder %s92, %s108
      %p110 = scmp.eq.s32.totalorder %s23, 0
      %p111 = por %p109, %p110
      %s112 = ssub.s32 %s24, %s36
      %p113 = scmp.eq.s32.totalorder %s112, 0
      %s115 = sadd.s32 %s114, 1
      %s116 = scalar_select %p113, %s114, %s115
      %p119 = pneg %p113
      %p120 = scmp.eq.s32.totalorder %s17, 3
      %p121 = por %p119, %p120
      %p122 = scmp.ne.s32.totalorder %s114, %s117
      %p123 = scmp.eq.s32.totalorder %s17, 0
      %p124 = por %p122, %p123
      %p125 = scmp.ne.s32.totalorder %s114, %s117
      %p126 = scmp.eq.s32.totalorder %s22, 3
      %p127 = por %p125, %p126
      %p128 = scmp.ne.s32.totalorder %s117, %s118
      %p129 = scmp.eq.s32.totalorder %s22, 0
      %p130 = por %p128, %p129
      %p131 = scmp.ne.s32.totalorder %s117, %s118
      %p132 = scmp.eq.s32.totalorder %s23, 3
      %p133 = por %p131, %p132
      %p135 = scmp.ne.s32.totalorder %s118, %s134
      %p136 = scmp.eq.s32.totalorder %s23, 0
      %p137 = por %p135, %p136
      %s138 = ssub.s32 %s24, %s36
      %p139 = scmp.eq.s32.totalorder %s138, 0
      %s141 = sadd.s32 %s140, 1
      %s142 = scalar_select %p139, %s140, %s141
      %p145 = pneg %p139
      %p146 = scmp.eq.s32.totalorder %s17, 3
      %p147 = por %p145, %p146
      %p148 = scmp.ne.s32.totalorder %s140, %s143
      %p149 = scmp.eq.s32.totalorder %s17, 0
      %p150 = por %p148, %p149
      %p151 = scmp.ne.s32.totalorder %s140, %s143
      %p152 = scmp.eq.s32.totalorder %s22, 3
      %p153 = por %p151, %p152
      %p154 = scmp.ne.s32.totalorder %s143, %s144
      %p155 = scmp.eq.s32.totalorder %s22, 0
      %p156 = por %p154, %p155
      %p157 = scmp.ne.s32.totalorder %s143, %s144
      %p158 = scmp.eq.s32.totalorder %s23, 3
      %p159 = por %p157, %p158
      %p161 = scmp.ne.s32.totalorder %s144, %s160
      %p162 = scmp.eq.s32.totalorder %s23, 0
      %p163 = por %p161, %p162
      %p164 = scmp.le.s32.totalorder 1, %s17
      %p165 = scmp.lt.s32.totalorder %s17, 5
      %p166 = pnand %p164, %p165
      %p167 = pneg %p166
      // Predicated region
      $region9: #{tpu_custom_call.1} parent=5 // pred_check
        _
      $region10: #{tpu_custom_call.1} parent=5 // pred_check_branch
        %169 = sbr.rel (%p166) target = $region12
      $region11: #{tpu_custom_call.1} parent=5 // pred_region
        %s170 = ssub.s32 %s17, 1
        // Predicated region
        $region13: #{tpu_custom_call.1} parent=11 // pred_check
          %p171 = pneg %p50
        $region14: #{tpu_custom_call.1} parent=11 // pred_check_branch
          %173 = sbr.rel (%p171) target = $region16
        $region15: #{tpu_custom_call.1} parent=11 // pred_region
          %175 = vsyncadd [#allocation3], 0
          %s177 = sshll.u32 %s0, 4
          %s178 = int_to_ptr.hbm [resolvable:$true] %s177
          %s179 = sshll.u32 [#allocation2], 4
          %s180 = int_to_ptr.vmem [resolvable:$true] %s179
          %182 = dma.hbm_to_vmem [thread:$0]  %s178, 256, %s180, [#allocation3]
        $region16: #{tpu_custom_call.1} parent=11 // pred_fallthru
          _
      $region12: #{tpu_custom_call.1} parent=5 // pred_fallthru
        _
      %p183 = scmp.lt.s32.totalorder %s17, 4
      // Predicated region
      $region17: #{tpu_custom_call.1} parent=5 // pred_check
        %p184 = pneg %p183
      $region18: #{tpu_custom_call.1} parent=5 // pred_check_branch
        %186 = sbr.rel (%p184) target = $region20
      $region19: #{tpu_custom_call.1} parent=5 // pred_region
        // Predicated region
        $region21: #{tpu_custom_call.1} parent=19 // pred_check
          %p187 = pneg %p72
        $region22: #{tpu_custom_call.1} parent=19 // pred_check_branch
          %189 = sbr.rel (%p187) target = $region24
        $region23: #{tpu_custom_call.1} parent=19 // pred_region
          %s190 = sand.u32 %s17, 1
          %s191 = scalar_lea.sflag [#allocation6], %s190
          %s192 = sand.u32 %s62, 1
          %s193 = smul.addr %s192, 128
          %s194 = scalar_lea.vmem [#allocation5], %s193
          %s195 = smul.u32 16, %s25
          %197 = vsyncadd %s191, 0
          %s198 = smul.addr %s195, 2
          %s199 = sadd.s32 %s24, %s198
          %s200 = smul.addr %s199, 8
          %s201 = scalar_lea.hbm %s1, %s200
          %s202 = sshll.u32 %s201, 4
          %s203 = int_to_ptr.hbm [resolvable:$true] %s202
          %s204 = sshll.u32 %s194, 4
          %s205 = int_to_ptr.vmem [resolvable:$true] %s204
          %210 = dma.hbm_to_vmem [thread:$0]  %s203, 2048, %s205, %s191, 256, 128, 8
        $region24: #{tpu_custom_call.1} parent=19 // pred_fallthru
          _
        // Predicated region
        $region25: #{tpu_custom_call.1} parent=19 // pred_check
          %p211 = pneg %p98
        $region26: #{tpu_custom_call.1} parent=19 // pred_check_branch
          %213 = sbr.rel (%p211) target = $region28
        $region27: #{tpu_custom_call.1} parent=19 // pred_region
          %s214 = sand.u32 %s17, 1
          %s215 = scalar_lea.sflag [#allocation6], %s214
          %s216 = sand.u32 %s88, 1
          %s217 = scalar_lea.vmem [#allocation7], %s216
          %219 = vsyncadd %s215, 0
          %s220 = scalar_lea.hbm %s2, %s24
          %s222 = sshll.u32 %s220, 4
          %s223 = int_to_ptr.hbm [resolvable:$true] %s222
          %s224 = sshll.u32 %s217, 4
          %s225 = int_to_ptr.vmem [resolvable:$true] %s224
          %227 = dma.hbm_to_vmem [thread:$0]  %s223, 16, %s225, %s215
        $region28: #{tpu_custom_call.1} parent=19 // pred_fallthru
          _
        // Predicated region
        $region29: #{tpu_custom_call.1} parent=19 // pred_check
          %p228 = pneg %p124
        $region30: #{tpu_custom_call.1} parent=19 // pred_check_branch
          %230 = sbr.rel (%p228) target = $region32
        $region31: #{tpu_custom_call.1} parent=19 // pred_region
          %p231 = scmp.lt.s32.totalorder %s24, 1
          %s232 = scalar_select %p231, %s24, 1
          %s233 = scalar_lea.vmem %s3, %s232
        $region32: #{tpu_custom_call.1} parent=19 // pred_fallthru
          _
      $region20: #{tpu_custom_call.1} parent=5 // pred_fallthru
        _
      %p234 = scmp.le.s32.totalorder 1, %s17
      %p235 = scmp.lt.s32.totalorder %s17, 5
      %p236 = pnand %p234, %p235
      %p237 = pneg %p236
      // Predicated region
      $region33: #{tpu_custom_call.1} parent=5 // pred_check
        _
      $region34: #{tpu_custom_call.1} parent=5 // pred_check_branch
        %239 = sbr.rel (%p236) target = $region36
      $region35: #{tpu_custom_call.1} parent=5 // pred_region
        %s240 = ssub.s32 %s17, 1
        // Predicated region
        $region37: #{tpu_custom_call.1} parent=35 // pred_check
          %p241 = pneg %p50
        $region38: #{tpu_custom_call.1} parent=35 // pred_check_branch
          %243 = sbr.rel (%p241) target = $region40
        $region39: #{tpu_custom_call.1} parent=35 // pred_region
          %245 = dma.done [#allocation3], 256
        $region40: #{tpu_custom_call.1} parent=35 // pred_fallthru
          _
        %s246 = sand.u32 %s22, 1
        %s247 = scalar_lea.sflag [#allocation6], %s246
        %s248 = sand.u32 %s65, 1
        %s249 = smul.addr %s248, 128
        %s250 = scalar_lea.vmem [#allocation5], %s249
        // Predicated region
        $region41: #{tpu_custom_call.1} parent=35 // pred_check
          %p251 = pneg %p78
        $region42: #{tpu_custom_call.1} parent=35 // pred_check_branch
          %253 = sbr.rel (%p251) target = $region44
        $region43: #{tpu_custom_call.1} parent=35 // pred_region
          %255 = dma.done %s247, 2048
        $region44: #{tpu_custom_call.1} parent=35 // pred_fallthru
          _
        %s256 = sand.u32 %s22, 1
        %s257 = scalar_lea.sflag [#allocation6], %s256
        %s258 = sand.u32 %s91, 1
        %s259 = scalar_lea.vmem [#allocation7], %s258
        // Predicated region
        $region45: #{tpu_custom_call.1} parent=35 // pred_check
          %p260 = pneg %p104
        $region46: #{tpu_custom_call.1} parent=35 // pred_check_branch
          %262 = sbr.rel (%p260) target = $region48
        $region47: #{tpu_custom_call.1} parent=35 // pred_region
          %264 = dma.done %s257, 16
        $region48: #{tpu_custom_call.1} parent=35 // pred_fallthru
          _
        %p265 = pneg %p50
        %p266 = pneg %p47
        %s267 = sand.u32 %s22, 1
        %s268 = scalar_lea.sflag [#allocation6], %s267
        %s269 = sand.u32 %s65, 1
        %s270 = smul.addr %s269, 128
        %s271 = scalar_lea.vmem [#allocation5], %s270
        %p272 = pneg %p78
        %p273 = pneg %p75
        %s274 = sand.u32 %s22, 1
        %s275 = scalar_lea.sflag [#allocation6], %s274
        %s276 = sand.u32 %s91, 1
        %s277 = scalar_lea.vmem [#allocation7], %s276
        %p278 = pneg %p104
        %p279 = pneg %p101
        %p280 = scmp.lt.s32.totalorder %s26, 1
        %s281 = scalar_select %p280, %s26, 1
        %s282 = scalar_lea.vmem %s3, %s281
        %p283 = pneg %p130
        %p284 = pneg %p127
        %p285 = pneg %p156
        %p286 = pneg %p153
        %s287 = sand.u32 %s143, 1
        %s288 = scalar_lea.sflag [#allocation4], %s287
        %s289 = sand.u32 %s143, 1
        %s290 = smul.addr %s289, 8
        %s291 = scalar_lea.vmem [#allocation8], %s290
        %s292 = smul.u32 16, %s27
        %p293 = scmp.lt.s32.totalorder %s26, 1
        %s294 = scalar_select %p293, %s26, 1
        %s295 = scalar_lea.vmem %s3, %s294
        %s296 = smul.u32 %s27, 128
        %s297 = sshra.s32 %s296, 7
        %s298 = sand.u32 %s296, 127
        %s299 = smul.addr %s297, 8
        %s300 = scalar_lea.vmem [#allocation2], %s299
        %v301 = vld [vmem:[%s300] sm:$0xff]
        %v302 = vld [vmem:[%s250] sm:$0xff]
        %v303 = vld [vmem:[%s250 + $0x8] sm:$0xff]
        %v304 = vld [vmem:[%s250 + $0x10] sm:$0xff]
        %v305 = vld [vmem:[%s250 + $0x18] sm:$0xff]
        %v306 = vld [vmem:[%s250 + $0x20] sm:$0xff]
        %v307 = vld [vmem:[%s250 + $0x28] sm:$0xff]
        %v308 = vld [vmem:[%s250 + $0x30] sm:$0xff]
        %v309 = vld [vmem:[%s250 + $0x38] sm:$0xff]
        %v310 = vld [vmem:[%s250 + $0x40] sm:$0xff]
        %v311 = vld [vmem:[%s250 + $0x48] sm:$0xff]
        %v312 = vld [vmem:[%s250 + $0x50] sm:$0xff]
        %v313 = vld [vmem:[%s250 + $0x58] sm:$0xff]
        %v314 = vld [vmem:[%s250 + $0x60] sm:$0xff]
        %v315 = vld [vmem:[%s250 + $0x68] sm:$0xff]
        %v316 = vld [vmem:[%s250 + $0x70] sm:$0xff]
        %v317 = vld [vmem:[%s250 + $0x78] sm:$0xff]
        %318 = vmatpush.msra.mxu0 %v317
        %319 = vmatpush.msra.mxu0 %v316
        %320 = vmatpush.msra.mxu0 %v315
        %321 = vmatpush.msra.mxu0 %v314
        %322 = vmatpush.msra.mxu0 %v313
        %323 = vmatpush.msra.mxu0 %v312
        %324 = vmatpush.msra.mxu0 %v311
        %325 = vmatpush.msra.mxu0 %v310
        %326 = vmatpush.msra.mxu0 %v309
        %327 = vmatpush.msra.mxu0 %v308
        %328 = vmatpush.msra.mxu0 %v307
        %329 = vmatpush.msra.mxu0 %v306
        %330 = vmatpush.msra.mxu0 %v305
        %331 = vmatpush.msra.mxu0 %v304
        %332 = vmatpush.msra.mxu0 %v303
        %333 = vmatpush.msra.mxu0 %v302
        %334 = vmatmul.f32.gmra.mxu0 %v301
        %v335 = vpop.f32.mrf.mxu0
        %v336 = vadd.f32 0.0, %v335
        %337 = vdwg.mxu0
        %p338 = scmp.eq.s32.totalorder %s27, 0
        // Predicated region
        $region49: #{tpu_custom_call.1} parent=35 // pred_check
          %p339 = pneg %p338
        $region50: #{tpu_custom_call.1} parent=35 // pred_check_branch
          %341 = sbr.rel (%p339) target = $region52
        $region51: #{tpu_custom_call.1} parent=35 // pred_region
          %342 = vst [vmem:[%s291] sm:$0xff] %v336
        $region52: #{tpu_custom_call.1} parent=35 // pred_fallthru
          _
        %p343 = scmp.gt.s32.totalorder %s27, 0
        // Predicated region
        $region53: #{tpu_custom_call.1} parent=35 // pred_check
          %p344 = pneg %p343
        $region54: #{tpu_custom_call.1} parent=35 // pred_check_branch
          %346 = sbr.rel (%p344) target = $region56
        $region55: #{tpu_custom_call.1} parent=35 // pred_region
          %v347 = vld [vmem:[%s291] sm:$0xff]
          %v348 = vadd.f32 %v347, %v336
          %349 = vst [vmem:[%s291] sm:$0xff] %v348
        $region56: #{tpu_custom_call.1} parent=35 // pred_fallthru
          _
        %p350 = scmp.eq.s32.totalorder %s27, 1
        // Predicated region
        $region57: #{tpu_custom_call.1} parent=35 // pred_check
          %p351 = pneg %p350
        $region58: #{tpu_custom_call.1} parent=35 // pred_check_branch
          %353 = sbr.rel (%p351) target = $region60
        $region59: #{tpu_custom_call.1} parent=35 // pred_region
          %v354 = vld [vmem:[%s291] sm:$0xff]
          %v355 = vrot.slane %v354, 4
          %v356 = vadd.f32 %v354, %v355
          %v357 = vrot.slane %v356, 2
          %v358 = vadd.f32 %v356, %v357
          %v359 = vrot.slane %v358, 1
          %v360 = vadd.f32 %v358, %v359
          %v361 = vmul.f32 %v360, 0.125
          %v362 = vsub.f32 %v354, %v361
          %v363 = vmul.f32 %v362, %v362
          %v364 = vrot.slane %v363, 4
          %v365 = vadd.f32 %v363, %v364
          %v366 = vrot.slane %v365, 2
          %v367 = vadd.f32 %v365, %v366
          %v368 = vrot.slane %v367, 1
          %v369 = vadd.f32 %v367, %v368
          %v370 = vmul.f32 %v369, 0.125
          %v371 = vadd.f32 %v370, 1e-05
          %v372 = vrsqrt.pop %v371
          %v373 = vmul.f32 %v372, %v371
          %v374 = vmul.f32 %v373, %v372
          %v375 = vmul.f32 0.5, %v374
          %v376 = vsub.f32 1.5, %v375
          %v377 = vmul.f32 %v372, %v376
          %vm378 = vweird.f32 %v371
          %vm379 = vweird.f32 %v372
          %vm380 = vmor %vm378, %vm379
          %v381 = vsel %vm380, %v372, %v377
          %v382 = vld [vmem:[%s259] sm:$0x1]
          %v383 = vmul.f32 %v381, %v382
          %v384 = vperm.slane %v383, 0
          %v385 = vmul.f32 %v362, %v384
          %v386 = vld [vmem:[%s295] sm:$0x1]
          %v388 = vperm.slane %v386, 0
          %v390 = vadd.f32 %v385, %v388
          %391 = vst [vmem:[%s291] sm:$0xff] %v390
        $region60: #{tpu_custom_call.1} parent=35 // pred_fallthru
          _
        %s392 = sand.u32 %s143, 1
        %s393 = scalar_lea.sflag [#allocation4], %s392
        %s394 = sand.u32 %s143, 1
        %s395 = smul.addr %s394, 8
        %s396 = scalar_lea.vmem [#allocation8], %s395
        // Predicated region
        $region61: #{tpu_custom_call.1} parent=35 // pred_check
          %p397 = pneg %p153
        $region62: #{tpu_custom_call.1} parent=35 // pred_check_branch
          %399 = sbr.rel (%p397) target = $region64
        $region63: #{tpu_custom_call.1} parent=35 // pred_region
          %401 = vsyncadd %s393, 0
          %s402 = smul.addr %s26, 8
          %s403 = scalar_lea.hbm %s4, %s402
          %s405 = sshll.u32 %s396, 4
          %s406 = int_to_ptr.vmem [resolvable:$true] %s405
          %s407 = sshll.u32 %s403, 4
          %s408 = int_to_ptr.hbm [resolvable:$true] %s407
          %410 = dma.vmem_to_hbm [thread:$0]  %s406, 128, %s408, %s393
        $region64: #{tpu_custom_call.1} parent=35 // pred_fallthru
          _
      $region36: #{tpu_custom_call.1} parent=5 // pred_fallthru
        _
      %p411 = scmp.le.s32.totalorder 2, %s17
      // Predicated region
      $region65: #{tpu_custom_call.1} parent=5 // pred_check
        %p412 = pneg %p411
      $region66: #{tpu_custom_call.1} parent=5 // pred_check_branch
        %414 = sbr.rel (%p412) target = $region68
      $region67: #{tpu_custom_call.1} parent=5 // pred_region
        %s415 = ssub.s32 %s17, 2
        // Predicated region
        $region69: #{tpu_custom_call.1} parent=67 // pred_check
          %p416 = pneg %p159
        $region70: #{tpu_custom_call.1} parent=67 // pred_check_branch
          %418 = sbr.rel (%p416) target = $region72
        $region71: #{tpu_custom_call.1} parent=67 // pred_region
          %s419 = sand.u32 %s144, 1
          %s420 = scalar_lea.sflag [#allocation4], %s419
          %s421 = sand.u32 %s144, 1
          %s422 = smul.addr %s421, 8
          %s423 = scalar_lea.vmem [#allocation8], %s422
          %425 = dma.done %s420, 128
        $region72: #{tpu_custom_call.1} parent=67 // pred_fallthru
          _
      $region68: #{tpu_custom_call.1} parent=5 // pred_fallthru
        _
    $region6: #{tpu_custom_call.1} parent=1 // loop_footer
      %s21 = sadd.s32 1, %s17
    $region7: #{tpu_custom_call.1} parent=1 // loop_footer_branch
      %16 = sbr.rel target = $region3
    $region8: #{tpu_custom_call.1} parent=1 // loop_exit
      _
    %426 = vsyncpa [#allocation3], 1
    %s427 = scalar_lea.sflag [#allocation3], 1
    %428 = vsyncpa %s427, 1
    %429 = vsyncpa [#allocation6], 1
    %s430 = scalar_lea.sflag [#allocation6], 1
    %431 = vsyncpa %s430, 1
    %432 = vsyncpa [#allocation4], 1
    %s433 = scalar_lea.sflag [#allocation4], 1
    %434 = vsyncpa %s433, 1

</llo_original>
